<compile_context>
chip_gen: v7x
topology: tpu7x:2x2x1
jax: 0.10.0
libtpu: 0.0.40
codegen_flags: <defaults>
</compile_context>

<pallas_src>
import functools

import jax
import jax.numpy as jnp
from jax.experimental import pallas as pl
from jax.experimental.pallas import tpu as pltpu


def ce_loss_kernel(logits_ref, targets_ref, out_ref, sum_ref, cnt_ref,
                   *, n_rows, tile_n, ignore_index):
    pid = pl.program_id(0)

    @pl.when(pid == 0)
    def _init():
        sum_ref[...] = jnp.zeros_like(sum_ref)
        cnt_ref[...] = jnp.zeros_like(cnt_ref)

    x = logits_ref[...].astype(jnp.float32)            # (TILE_N, C)
    t = targets_ref[...]                               # (TILE_N, 1) int32

    # valid rows: inside the real array (last tile may be padded) and not ignored
    row = jax.lax.broadcasted_iota(jnp.int32, (tile_n, 1), 0) + pid * tile_n
    valid = jnp.logical_and(row < n_rows, t != ignore_index)            # (TILE_N, 1)

    # numerically-stable log-sum-exp along the class (lane) axis
    m = jnp.max(x, axis=-1, keepdims=True)                              # (TILE_N, 1)
    lse = jnp.log(jnp.sum(jnp.exp(x - m), axis=-1, keepdims=True)) + m  # (TILE_N, 1)

    # pick the target logit with a fused masked lane reduction (no dynamic gather)
    col = jax.lax.broadcasted_iota(jnp.int32, x.shape, 1)               # (TILE_N, C)
    picked = jnp.sum(jnp.where(col == t, x, 0.0), axis=-1, keepdims=True)

    per_sample = jnp.where(valid, lse - picked, 0.0)                    # -log p[target]

    # cheap per-row VPU accumulation; cross-sublane reduce only at finalize
    sum_ref[...] += per_sample
    cnt_ref[...] += valid.astype(jnp.float32)

    @pl.when(pid == pl.num_programs(0) - 1)
    def _finalize():
        total = jnp.sum(sum_ref[...], axis=0, keepdims=True)            # (1, 1)
        count = jnp.sum(cnt_ref[...], axis=0, keepdims=True)            # (1, 1)
        out_ref[...] = total / count


def _choose_tile_n(n, c, itemsize, tile_n=None):
    # minimum sublane multiple for the native packed tile of this dtype
    min_sub = 8 * max(1, 4 // itemsize)          # f32: 8, bf16: 16, int8/fp8: 32
    if tile_n is None:
        target_bytes = 4 * 1024 * 1024           # ~4 MiB per logits input buffer
        tile_n = target_bytes // max(1, c * itemsize)
        tile_n = min(max(tile_n, min_sub), 2048)
    tile_n = max(min_sub, (int(tile_n) // min_sub) * min_sub)
    n_pad = -(-n // min_sub) * min_sub
    return min(tile_n, n_pad)


def multi_label_loss(outputs, targets, *, tile_n=None, ignore_index=-100):
    """CrossEntropyLoss(outputs, targets): mean reduction, ignore_index=-100.

    outputs: (N, C) float logits (any float dtype; streamed in native dtype)
    targets: (N,)   int class indices
    returns: scalar float32 loss
    """
    n, c = outputs.shape
    itemsize = jnp.dtype(outputs.dtype).itemsize
    tn = _choose_tile_n(n, c, itemsize, tile_n)
    grid_n = pl.cdiv(n, tn)

    targets_2d = targets.astype(jnp.int32).reshape(n, 1)

    kernel = functools.partial(
        ce_loss_kernel, n_rows=n, tile_n=tn, ignore_index=ignore_index)

    out = pl.pallas_call(
        kernel,
        out_shape=jax.ShapeDtypeStruct((1, 1), jnp.float32),
        grid_spec=pltpu.PrefetchScalarGridSpec(
            num_scalar_prefetch=0,
            grid=(grid_n,),
            in_specs=[
                pl.BlockSpec((tn, c), lambda i: (i, 0)),   # logits tile
                pl.BlockSpec((tn, 1), lambda i: (i, 0)),   # targets tile
            ],
            out_specs=pl.BlockSpec((1, 1), lambda i: (0, 0)),
            scratch_shapes=[
                pltpu.VMEM((tn, 1), jnp.float32),   # per-row running loss
                pltpu.VMEM((tn, 1), jnp.float32),   # per-row running valid count
            ],
        ),
        compiler_params=pltpu.CompilerParams(
            dimension_semantics=("arbitrary",)),
    )(outputs, targets_2d)
    return out[0, 0]


if __name__ == "__main__":
    key = jax.random.PRNGKey(0)
    k1, k2, k3, k4, k5, k6 = jax.random.split(key, 6)

    # Test 1: small f32 case (single tile).
    N1, C1 = 8, 32
    out1 = jax.random.normal(k1, (N1, C1), dtype=jnp.float32)
    tgt1 = jax.random.randint(k2, (N1,), 0, C1, dtype=jnp.int32)
    loss1 = multi_label_loss(out1, tgt1)
    jax.block_until_ready(loss1)
    ref1 = -jnp.mean(jax.nn.log_softmax(out1, axis=-1)[jnp.arange(N1), tgt1])
    assert jnp.allclose(loss1, ref1, atol=1e-5, rtol=1e-5), (loss1, ref1)

    # Test 2: bf16 logits streamed in native dtype, N not a multiple of 8
    # (exercises padded-row masking in the last tile).
    N2, C2 = 13, 160
    out2 = jax.random.normal(k3, (N2, C2), dtype=jnp.bfloat16)
    tgt2 = jax.random.randint(k4, (N2,), 0, C2, dtype=jnp.int32)
    loss2 = multi_label_loss(out2, tgt2)
    jax.block_until_ready(loss2)
    lp2 = jax.nn.log_softmax(out2.astype(jnp.float32), axis=-1)
    ref2 = -jnp.mean(lp2[jnp.arange(N2), tgt2])
    assert jnp.allclose(loss2, ref2, atol=1e-4, rtol=1e-4), (loss2, ref2)

    # Test 3: multi-tile grid (forced tile_n=16 over N=40) + ignore_index=-100.
    N3, C3 = 40, 160
    out3 = jax.random.normal(k5, (N3, C3), dtype=jnp.float32)
    tgt3 = jax.random.randint(k6, (N3,), 0, C3, dtype=jnp.int32)
    tgt3 = tgt3.at[5].set(-100).at[37].set(-100)
    loss3 = multi_label_loss(out3, tgt3, tile_n=16)
    jax.block_until_ready(loss3)
    lp3 = jax.nn.log_softmax(out3, axis=-1)
    valid3 = tgt3 != -100
    picked3 = lp3[jnp.arange(N3), jnp.where(valid3, tgt3, 0)]
    ref3 = -jnp.sum(jnp.where(valid3, picked3, 0.0)) / jnp.sum(valid3)
    assert jnp.allclose(loss3, ref3, atol=1e-5, rtol=1e-5), (loss3, ref3)

    print("KERNEL_OK")
</pallas_src>

<mosaic_0001>
module attributes {stable_mosaic.version = 11 : i64} {
  func.func @ce_loss_kernel(%arg0: i32, %arg1: memref<8x32xf32, #tpu.memory_space<vmem>>, %arg2: memref<8x1xi32, #tpu.memory_space<vmem>>, %arg3: memref<1x1xf32, #tpu.memory_space<vmem>>, %arg4: memref<8x1xf32, #tpu.memory_space<vmem>>, %arg5: memref<8x1xf32, #tpu.memory_space<vmem>>) attributes {dimension_semantics = [#tpu.dimension_semantics<arbitrary>], iteration_bounds = array<i64: 1>, scalar_prefetch = 0 : i64, scratch_operands = 2 : i64, tpu.core_type = #tpu.core_type<tc>, window_params = [{transform_indices = @transform_0, window_bounds = array<i64: 8, 32>}, {transform_indices = @transform_1, window_bounds = array<i64: 8, 1>}, {pipeline_mode = #tpu.pipeline_mode<synchronous>, transform_indices = @transform_2, window_bounds = array<i64: 1, 1>}]} {
    %c0_i32 = arith.constant 0 : i32
    %0 = arith.cmpi eq, %arg0, %c0_i32 : i32
    %1 = arith.extui %0 : i1 to i32
    %c0_i32_0 = arith.constant 0 : i32
    %2 = arith.cmpi ne, %1, %c0_i32_0 : i32
    scf.if %2 {
      %cst_19 = arith.constant 0.000000e+00 : f32
      %44 = vector.broadcast %cst_19 : f32 to vector<8x1xf32>
      %c0_20 = arith.constant 0 : index
      %c0_21 = arith.constant 0 : index
      %45 = vector.load %arg4[%c0_20, %c0_21] : memref<8x1xf32, #tpu.memory_space<vmem>>, vector<8x1xf32>
      tpu.vector_store %arg4[%c0_20, %c0_21], %44 {strides = array<i32>} : memref<8x1xf32, #tpu.memory_space<vmem>>, vector<8x1xf32>,
      %cst_22 = arith.constant 0.000000e+00 : f32
      %46 = vector.broadcast %cst_22 : f32 to vector<8x1xf32>
      %c0_23 = arith.constant 0 : index
      %c0_24 = arith.constant 0 : index
      %47 = vector.load %arg5[%c0_23, %c0_24] : memref<8x1xf32, #tpu.memory_space<vmem>>, vector<8x1xf32>
      tpu.vector_store %arg5[%c0_23, %c0_24], %46 {strides = array<i32>} : memref<8x1xf32, #tpu.memory_space<vmem>>, vector<8x1xf32>,
    } else {
    }
    %c0 = arith.constant 0 : index
    %c0_1 = arith.constant 0 : index
    %3 = vector.load %arg1[%c0, %c0_1] : memref<8x32xf32, #tpu.memory_space<vmem>>, vector<8x32xf32>
    %c0_2 = arith.constant 0 : index
    %c0_3 = arith.constant 0 : index
    %4 = vector.load %arg2[%c0_2, %c0_3] : memref<8x1xi32, #tpu.memory_space<vmem>>, vector<8x1xi32>
    %5 = tpu.iota {dimensions = array<i32: 0>} : vector<8x1xi32>
    %c8_i32 = arith.constant 8 : i32
    %6 = arith.muli %arg0, %c8_i32 : i32
    %7 = vector.broadcast %6 : i32 to vector<8x1xi32>
    %8 = arith.addi %5, %7 : vector<8x1xi32>
    %c8_i32_4 = arith.constant 8 : i32
    %9 = vector.broadcast %c8_i32_4 : i32 to vector<8x1xi32>
    %10 = arith.cmpi slt, %8, %9 : vector<8x1xi32>
    %c-100_i32 = arith.constant -100 : i32
    %11 = vector.broadcast %c-100_i32 : i32 to vector<8x1xi32>
    %12 = arith.cmpi ne, %4, %11 : vector<8x1xi32>
    %13 = arith.andi %10, %12 : vector<8x1xi1>
    %cst = arith.constant dense<0xFF800000> : vector<8xf32>
    %14 = vector.multi_reduction <maximumf>, %3, %cst [1] : vector<8x32xf32> to vector<8xf32>
    %15 = vector.shape_cast %14 : vector<8xf32> to vector<8x1xf32>
    %16 = vector.broadcast %15 : vector<8x1xf32> to vector<8x32xf32>
    %17 = arith.subf %3, %16 : vector<8x32xf32>
    %18 = math.exp %17 : vector<8x32xf32>
    %cst_5 = arith.constant dense<0.000000e+00> : vector<8xf32>
    %19 = vector.multi_reduction <add>, %18, %cst_5 [1] : vector<8x32xf32> to vector<8xf32>
    %20 = vector.shape_cast %19 : vector<8xf32> to vector<8x1xf32>
    %21 = math.log %20 : vector<8x1xf32>
    %22 = arith.addf %21, %15 : vector<8x1xf32>
    %23 = tpu.iota {dimensions = array<i32: 1>} : vector<8x32xi32>
    %24 = vector.broadcast %4 : vector<8x1xi32> to vector<8x32xi32>
    %25 = arith.cmpi eq, %23, %24 : vector<8x32xi32>
    %cst_6 = arith.constant 0.000000e+00 : f32
    %26 = vector.broadcast %cst_6 : f32 to vector<8x32xf32>
    %27 = arith.select %25, %3, %26 : vector<8x32xi1>, vector<8x32xf32>
    %cst_7 = arith.constant dense<0.000000e+00> : vector<8xf32>
    %28 = vector.multi_reduction <add>, %27, %cst_7 [1] : vector<8x32xf32> to vector<8xf32>
    %29 = vector.shape_cast %28 : vector<8xf32> to vector<8x1xf32>
    %30 = arith.subf %22, %29 : vector<8x1xf32>
    %cst_8 = arith.constant 0.000000e+00 : f32
    %31 = vector.broadcast %cst_8 : f32 to vector<8x1xf32>
    %32 = arith.select %13, %30, %31 : vector<8x1xi1>, vector<8x1xf32>
    %c0_9 = arith.constant 0 : index
    %c0_10 = arith.constant 0 : index
    %33 = vector.load %arg4[%c0_9, %c0_10] : memref<8x1xf32, #tpu.memory_space<vmem>>, vector<8x1xf32>
    %34 = arith.addf %33, %32 : vector<8x1xf32>
    %c0_11 = arith.constant 0 : index
    %c0_12 = arith.constant 0 : index
    %35 = vector.load %arg4[%c0_11, %c0_12] : memref<8x1xf32, #tpu.memory_space<vmem>>, vector<8x1xf32>
    tpu.vector_store %arg4[%c0_11, %c0_12], %34 {strides = array<i32>} : memref<8x1xf32, #tpu.memory_space<vmem>>, vector<8x1xf32>,
    %c0_13 = arith.constant 0 : index
    %c0_14 = arith.constant 0 : index
    %36 = vector.load %arg5[%c0_13, %c0_14] : memref<8x1xf32, #tpu.memory_space<vmem>>, vector<8x1xf32>
    %37 = arith.extui %13 : vector<8x1xi1> to vector<8x1xi32>
    %38 = arith.sitofp %37 : vector<8x1xi32> to vector<8x1xf32>
    %39 = arith.addf %36, %38 : vector<8x1xf32>
    %c0_15 = arith.constant 0 : index
    %c0_16 = arith.constant 0 : index
    %40 = vector.load %arg5[%c0_15, %c0_16] : memref<8x1xf32, #tpu.memory_space<vmem>>, vector<8x1xf32>
    tpu.vector_store %arg5[%c0_15, %c0_16], %39 {strides = array<i32>} : memref<8x1xf32, #tpu.memory_space<vmem>>, vector<8x1xf32>,
    %c0_i32_17 = arith.constant 0 : i32
    %41 = arith.cmpi eq, %arg0, %c0_i32_17 : i32
    %42 = arith.extui %41 : i1 to i32
    %c0_i32_18 = arith.constant 0 : i32
    %43 = arith.cmpi ne, %42, %c0_i32_18 : i32
    scf.if %43 {
      %c0_19 = arith.constant 0 : index
      %c0_20 = arith.constant 0 : index
      %44 = vector.load %arg4[%c0_19, %c0_20] : memref<8x1xf32, #tpu.memory_space<vmem>>, vector<8x1xf32>
      %cst_21 = arith.constant dense<0.000000e+00> : vector<1xf32>
      %45 = vector.multi_reduction <add>, %44, %cst_21 [0] : vector<8x1xf32> to vector<1xf32>
      %46 = vector.shape_cast %45 : vector<1xf32> to vector<1x1xf32>
      %c0_22 = arith.constant 0 : index
      %c0_23 = arith.constant 0 : index
      %47 = vector.load %arg5[%c0_22, %c0_23] : memref<8x1xf32, #tpu.memory_space<vmem>>, vector<8x1xf32>
      %cst_24 = arith.constant dense<0.000000e+00> : vector<1xf32>
      %48 = vector.multi_reduction <add>, %47, %cst_24 [0] : vector<8x1xf32> to vector<1xf32>
      %49 = vector.shape_cast %48 : vector<1xf32> to vector<1x1xf32>
      %50 = arith.divf %46, %49 : vector<1x1xf32>
      %c0_25 = arith.constant 0 : index
      %c0_26 = arith.constant 0 : index
      %51 = vector.load %arg3[%c0_25, %c0_26] : memref<1x1xf32, #tpu.memory_space<vmem>>, vector<1x1xf32>
      tpu.vector_store %arg3[%c0_25, %c0_26], %50 {strides = array<i32>} : memref<1x1xf32, #tpu.memory_space<vmem>>, vector<1x1xf32>,
    } else {
    }
    return
  }
  func.func @transform_0(%arg0: i32) -> (i32, i32) {
    %c0_i32 = arith.constant 0 : i32
    %c0_i32_0 = arith.constant 0 : i32
    return %arg0, %c0_i32 : i32, i32
  }
  func.func @transform_1(%arg0: i32) -> (i32, i32) {
    %c0_i32 = arith.constant 0 : i32
    %c0_i32_0 = arith.constant 0 : i32
    return %arg0, %c0_i32 : i32, i32
  }
  func.func @transform_2(%arg0: i32) -> (i32, i32) {
    %c0_i32 = arith.constant 0 : i32
    %c0_i32_0 = arith.constant 0 : i32
    %c0_i32_1 = arith.constant 0 : i32
    return %c0_i32, %c0_i32_0 : i32, i32
  }
}

</mosaic_0001>

<llo_original>
// kernel: tpu_custom_call.1
$region0: #{tpu_custom_call.1}
  #allocation0 [shape = 'u32[]', space=smem, size = 0x4, offset = 0x4, fixed_abs, tag = 'smem constant byte address 0x4 - core index']
  #allocation1 [shape = 'u32[144,128]{1,0:T(1,128)}', space=vmem, size = 0x12000, scoped, tag = 'internal scratch']
  #allocation2 [shape = 'f32[8,1]{1,0:T(8,128)}', space=vmem, size = 0x1000, scoped, tag = 'scratch operand']
  #allocation3 [shape = 'f32[8,1]{1,0:T(8,128)}', space=vmem, size = 0x1000, scoped, tag = 'scratch operand']
  %s0 = inlined_call_operand.vmem [shape: f32[8,32], index: 0, kind: input, shape index: {}]
  %s1 = inlined_call_operand.vmem [shape: s32[8,1], index: 1, kind: input, shape index: {}]
  %s2 = inlined_call_operand.hbm [shape: f32[1,1], index: 2, kind: output, shape index: {}]
  %s3 = sld [smem:[#allocation0]]
  $region26: #{tpu_custom_call.1} parent=0
    _
  %s5 = ssub.s32 1, %s3
  %s6 = scalar_select 0, %s5, %s3
  $region1: #{tpu_custom_call.1} parent=0
    #allocation4 [shape = 'u8[512]{0}', space=vmem, size = 0x400, scoped, tag = 'output window, operand 0, single buffered']
    #allocation5 [shape = 's32[1]{0}', space=sflag, size = 0x4, scoped, tag = 'scoped memory for tpu_custom_call.1']
    %7 = vsyncpa [#allocation5], 0
    // Predicated region
    $region2: #{tpu_custom_call.1} parent=1 // pred_check
      _
    $region3: #{tpu_custom_call.1} parent=1 // pred_check_branch
      %9 = sbr.rel (0) target = $region5
    $region4: #{tpu_custom_call.1} parent=1 // pred_region
      _
    $region5: #{tpu_custom_call.1} parent=1 // pred_fallthru
      _
    // Predicated region
    $region6: #{tpu_custom_call.1} parent=1 // pred_check
      _
    $region7: #{tpu_custom_call.1} parent=1 // pred_check_branch
      %11 = sbr.rel (0) target = $region9
    $region8: #{tpu_custom_call.1} parent=1 // pred_region
      _
    $region9: #{tpu_custom_call.1} parent=1 // pred_fallthru
      _
    %p12 = scmp.eq.s32.totalorder 0, 0
    // Predicated region
    $region10: #{tpu_custom_call.1} parent=1 // pred_check
      %p13 = pneg %p12
    $region11: #{tpu_custom_call.1} parent=1 // pred_check_branch
      %15 = sbr.rel (%p13) target = $region13
    $region12: #{tpu_custom_call.1} parent=1 // pred_region
      %vm16 = vcmask 7168
      %17 = vst.msk [vmem:[#allocation2] sm:$0xff] %vm16, 0.0
      %18 = vst.msk [vmem:[#allocation3] sm:$0xff] %vm16, 0.0
    $region13: #{tpu_custom_call.1} parent=1 // pred_fallthru
      _
    %v19 = vld [vmem:[%s0] sm:$0xff]
    %v20 = vld [vmem:[%s1] sm:$0xff]
    %v21 = vlaneseq
    %v22 = vshrl.u32 %v21, 7
    %s23 = smul.u32 0, 8
    %v24 = vstv %s23
    %v25 = vadd.s32 %v22, %v24
    %vm26 = vcmp.lt.s32.totalorder %v25, 8
    %vm27 = vcmp.ne.s32.totalorder %v20, 4294967196
    %vm28 = vmand %vm26, %vm27
    %vm29 = vcmask 261120
    %v30 = vsel %vm29, %v19, -inf
    %31 = vmax.xlane.f32.xlu0 %v30
    %v32 = vpop.xlane.xlu0 %31
    %v33 = vsub.f32 %v19, %v32
    %v34 = vmul.f32 %v33, 1.442695
    %v35 = vpow.pop %v34
    %v36 = vsel %vm29, %v35, 0.0
    %37 = vadd.xlane.f32.xlu0 %v36
    %v38 = vpop.xlane.xlu0 %37
    %v39 = vlog2.pop %v38
    %v40 = vmul.f32 %v39, 0.6931472
    %v41 = vadd.f32 %v40, %v32
    %v42 = vlaneseq
    %v43 = vand.u32 %v42, 127
    %44 = vset.pattern.permute.xlu0 0
    %45 = vperm.xlu0 %44, %v20
    %v46 = vpop.permute.xlu0 %45
    %vm47 = vcmp.eq.s32.totalorder %v43, %v46
    %v48 = vsel %vm47, %v19, 0.0
    %v49 = vsel %vm29, %v48, 0.0
    %50 = vadd.xlane.f32.xlu0 %v49
    %v51 = vpop.xlane.xlu0 %50
    %v52 = vsub.f32 %v41, %v51
    %v53 = vsel %vm28, %v52, 0.0
    %v54 = vld [vmem:[#allocation2] sm:$0xff]
    %v55 = vadd.f32 %v54, %v53
    %vm56 = vcmask 7168
    %57 = vst.msk [vmem:[#allocation2] sm:$0xff] %vm56, %v55
    %v58 = vld [vmem:[#allocation3] sm:$0xff]
    %v59 = vsel %vm28, 1, 0
    %v60 = vcvt.s32.f32 %v59
    %v61 = vadd.f32 %v58, %v60
    %62 = vst.msk [vmem:[#allocation3] sm:$0xff] %vm56, %v61
    // Predicated region
    $region14: #{tpu_custom_call.1} parent=1 // pred_check
      %p63 = pneg %p12
    $region15: #{tpu_custom_call.1} parent=1 // pred_check_branch
      %65 = sbr.rel (%p63) target = $region17
    $region16: #{tpu_custom_call.1} parent=1 // pred_region
      %v66 = vld [vmem:[#allocation2] sm:$0xff]
      %v67 = vsel %vm56, %v66, 0.0
      %v68 = vrot.slane %v67, 4
      %v69 = vadd.f32 %v67, %v68
      %v70 = vrot.slane %v69, 2
      %v71 = vadd.f32 %v69, %v70
      %v72 = vrot.slane %v71, 1
      %v73 = vadd.f32 %v71, %v72
      %v74 = vld [vmem:[#allocation3] sm:$0xff]
      %v75 = vsel %vm56, %v74, 0.0
      %v76 = vrot.slane %v75, 4
      %v77 = vadd.f32 %v75, %v76
      %v78 = vrot.slane %v77, 2
      %v79 = vadd.f32 %v77, %v78
      %v80 = vrot.slane %v79, 1
      %v81 = vadd.f32 %v79, %v80
      %v82 = vrcp.pop %v81
      %v83 = vmul.f32 %v73, %v82
      %vm84 = vcmask 0
      %85 = vst.msk [vmem:[#allocation4] sm:$0x1] %vm84, %v83
    $region17: #{tpu_custom_call.1} parent=1 // pred_fallthru
      _
    // Predicated region
    $region18: #{tpu_custom_call.1} parent=1 // pred_check
      _
    $region19: #{tpu_custom_call.1} parent=1 // pred_check_branch
      %87 = sbr.rel (0) target = $region21
    $region20: #{tpu_custom_call.1} parent=1 // pred_region
      %s89 = ssub.s32 16, 16
      %90 = vsyncadd [#allocation5], %s89
      %s92 = sshll.u32 [#allocation4], 4
      %s93 = int_to_ptr.vmem [resolvable:$true] %s92
      %95 = dma.vmem_to_hbm [thread:$0]  %s93, 16, %s2, [#allocation5]
    $region21: #{tpu_custom_call.1} parent=1 // pred_fallthru
      _
    // Predicated region
    $region22: #{tpu_custom_call.1} parent=1 // pred_check
      _
    $region23: #{tpu_custom_call.1} parent=1 // pred_check_branch
      %97 = sbr.rel (0) target = $region25
    $region24: #{tpu_custom_call.1} parent=1 // pred_region
      %98 = dma.done [#allocation5], 16
    $region25: #{tpu_custom_call.1} parent=1 // pred_fallthru
      _
    %99 = vsyncpa [#allocation5], 1

</llo_original>
